<compile_context>
chip_gen: v7x
topology: tpu7x:2x2x1
jax: 0.10.0
libtpu: 0.0.40
codegen_flags: <defaults>
</compile_context>

<pallas_src>
import functools

import jax
import jax.numpy as jnp
from jax.experimental import pallas as pl
from jax.experimental.pallas import tpu as pltpu

_LANE = 128     # vreg lane width
_SUBLANE = 8    # f32 sublane count


def _round_up(x, m):
    return (x + m - 1) // m * m


def _vmem_budget():
    """Generation-aware (budget, scoped-limit) in bytes.

    v5e/v6e have 128 MiB of VMEM, v7x has 64 MiB per TensorCore; fall back to
    the conservative 64 MiB figure if the query is unavailable.
    """
    cap = None
    try:
        cap = getattr(pltpu.get_tpu_info(), "vmem_capacity_bytes", None)
    except Exception:
        cap = None
    if not cap or cap <= 0:
        cap = 64 * 1024 * 1024
    return int(cap * 0.70), int(cap * 0.85)


def _mlp_kernel(x_ref, w1_ref, w2_ref, o_ref, acc_ref):
    """One (batch-tile, hid-tile) step of out = relu(x @ w1) @ w2.

    ReLU is elementwise along hid, so applying it per hid chunk is exact.
    """
    k = pl.program_id(1)

    @pl.when(k == 0)
    def _():
        acc_ref[...] = jnp.zeros_like(acc_ref)

    h = jnp.dot(x_ref[...], w1_ref[...], preferred_element_type=jnp.float32)
    h = jnp.maximum(h, 0.0)
    acc_ref[...] += jnp.dot(h.astype(w2_ref.dtype), w2_ref[...],
                            preferred_element_type=jnp.float32)

    @pl.when(k == pl.num_programs(1) - 1)
    def _():
        o_ref[...] = acc_ref[...].astype(o_ref.dtype)


def mlp_reference(x, w1, w2):
    """Pure-JAX reference of the PyTorch forward."""
    return jnp.maximum(x @ w1, 0.0) @ w2


def _maybe_pad(a, pads):
    if all(p == (0, 0) for p in pads):
        return a          # already aligned -> no pad op emitted
    return jnp.pad(a, pads)


def mlp_forward(x, w1, w2, *, block_m=256, compute_dtype=None,
                use_pallas=None, vmem_budget_bytes=None):
    """x: [B, in], w1: [in, hid], w2: [hid, out] -> [B, out] = relu(x@w1)@w2."""
    B, in_size = x.shape
    in2, hid_size = w1.shape
    hid2, out_size = w2.shape
    assert in2 == in_size and hid2 == hid_size

    if use_pallas is None:
        # Tiny problems: per-grid-step + DMA overhead dwarfs compute; let XLA fuse.
        use_pallas = B * in_size * hid_size >= (1 << 18)
    if not use_pallas:
        return mlp_reference(x, w1, w2)

    out_dtype = x.dtype
    if compute_dtype is not None:
        compute_dtype = jnp.dtype(compute_dtype)
        if compute_dtype != x.dtype:
            x = x.astype(compute_dtype)
            w1 = w1.astype(compute_dtype)
            w2 = w2.astype(compute_dtype)

    x_isz = jnp.dtype(x.dtype).itemsize
    w_isz = jnp.dtype(w1.dtype).itemsize
    budget, vmem_limit = _vmem_budget()
    if vmem_budget_bytes is not None:          # testing / tuning knob
        budget = int(vmem_budget_bytes)

    # Lane-dense feature dims (zero padding is inert under matmul + ReLU).
    in_p = _round_up(in_size, _LANE)
    hid_p = _round_up(hid_size, _LANE)
    out_p = _round_up(out_size, _LANE)

    # ---- hid (reduction) tiling ------------------------------------------
    # Keep the whole weights VMEM-resident (single-buffered, fetched once) when
    # they fit; otherwise stream balanced 128-aligned hid tiles, double-buffered.
    w_budget = int(budget * 0.6)
    full_w_bytes = (in_p * hid_p + hid_p * out_p) * w_isz
    if full_w_bytes <= w_budget:
        tk, wbuf = hid_p, 1
    else:
        wbuf = 2
        per_col = (in_p + out_p) * w_isz
        tk = max(_LANE, (w_budget // (wbuf * per_col)) // _LANE * _LANE)
        tk = min(tk, hid_p)
        nk_est = pl.cdiv(hid_p, tk)
        tk = min(tk, _round_up(pl.cdiv(hid_p, nk_est), _LANE))  # balance -> less pad
        # TODO(synk): extremely large in/out dims would additionally need an
        # out-dimension grid axis; not required for this module's shapes.
    hid_pp = _round_up(hid_p, tk)
    nk = hid_pp // tk

    # ---- batch tiling ------------------------------------------------------
    # Largest tile within budget, floor one full 128-row MXU tile (unless B is
    # smaller), then capped so the parallel batch axis has >=2 (ideally >=4)
    # steps for DMA pipelining and v7x's two TensorCores.
    xbuf = 3 if (in_p <= 256 and out_p <= 256 and B >= 4 * _LANE) else 2
    tm = _round_up(min(block_m, _round_up(B, _SUBLANE)), _SUBLANE)
    tm_floor = min(_LANE, _round_up(B, _SUBLANE))

    def footprint(t):
        w_bytes = wbuf * (in_p * tk + tk * out_p) * w_isz
        io_bytes = xbuf * t * in_p * x_isz + 2 * t * out_p * x_isz
        work = t * tk * 4 + t * out_p * 4        # f32 intermediate h + acc scratch
        return w_bytes + io_bytes + work

    while tm > tm_floor and footprint(tm) > budget:
        if tm > 2 * _LANE:
            tm = _round_up(tm // 2, _LANE)
        elif tm > _LANE:
            tm = _LANE
        else:
            tm = tm_floor

    if B >= 2 * _LANE:
        target_steps = 4 if B >= 4 * _LANE else 2
        tm = min(tm, max(_LANE, _round_up(pl.cdiv(B, target_steps), _LANE)))

    b_p = _round_up(B, tm)
    nb = b_p // tm

    x_p = _maybe_pad(x, ((0, b_p - B), (0, in_p - in_size)))
    w1_p = _maybe_pad(w1, ((0, in_p - in_size), (0, hid_pp - hid_size)))
    w2_p = _maybe_pad(w2, ((0, hid_pp - hid_size), (0, out_p - out_size)))

    flops = 2 * b_p * hid_pp * (in_p + out_p)
    bytes_accessed = (b_p * (in_p + out_p) * x_isz
                      + (in_p * hid_pp + hid_pp * out_p) * w_isz
                      * (nb if nk > 1 else 1))

    def run(use_pipeline_modes):
        def bspec(shape, imap, buffers):
            if use_pipeline_modes and buffers != 2:
                return pl.BlockSpec(shape, imap, pipeline_mode=pl.Buffered(buffers))
            return pl.BlockSpec(shape, imap)

        grid_spec = pltpu.PrefetchScalarGridSpec(
            num_scalar_prefetch=0,
            grid=(nb, nk),
            in_specs=[
                bspec((tm, in_p), lambda i, k: (i, 0), xbuf),    # x tile
                bspec((in_p, tk), lambda i, k: (0, k), wbuf),    # w1 (resident if nk==1)
                bspec((tk, out_p), lambda i, k: (k, 0), wbuf),   # w2 (resident if nk==1)
            ],
            out_specs=pl.BlockSpec((tm, out_p), lambda i, k: (i, 0)),
            scratch_shapes=[pltpu.VMEM((tm, out_p), jnp.float32)],
        )
        return pl.pallas_call(
            _mlp_kernel,
            out_shape=jax.ShapeDtypeStruct((b_p, out_p), out_dtype),
            grid_spec=grid_spec,
            compiler_params=pltpu.CompilerParams(
                dimension_semantics=("parallel", "arbitrary"),
                vmem_limit_bytes=vmem_limit),
            cost_estimate=pl.CostEstimate(
                flops=flops, transcendentals=0, bytes_accessed=bytes_accessed),
        )(x_p, w1_p, w2_p)

    try:
        out_padded = run(True)
    except Exception:
        # Fallback for jax versions without BlockSpec(pipeline_mode=...).
        out_padded = run(False)

    return out_padded[:B, :out_size]


def init_mlp_params(key, in_size, hid_size, out_size, dtype=jnp.float32):
    """Deterministic init mimicking nn.Linear kaiming-uniform (bias=False).

    Returned weights are already transposed to [in, out] layout.
    """
    k1, k2 = jax.random.split(key)
    b1 = 1.0 / jnp.sqrt(in_size)
    b2 = 1.0 / jnp.sqrt(hid_size)
    w1 = jax.random.uniform(k1, (in_size, hid_size), dtype, minval=-b1, maxval=b1)
    w2 = jax.random.uniform(k2, (hid_size, out_size), dtype, minval=-b2, maxval=b2)
    return w1, w2


if __name__ == "__main__":
    key = jax.random.PRNGKey(0)
    kx, kp, kx2, kp2, kx3, kp3 = jax.random.split(key, 6)

    # 1) Toy shape matching the module's typical usage; force the Pallas path
    #    (auto-dispatch would hand this to XLA).
    B, in_size, hid_size, out_size = 8, 16, 32, 8
    x = jax.random.normal(kx, (B, in_size), jnp.float32)
    w1, w2 = init_mlp_params(kp, in_size, hid_size, out_size)
    out = jax.block_until_ready(mlp_forward(x, w1, w2, use_pallas=True))
    ref = mlp_reference(x, w1, w2)
    assert out.shape == (B, out_size)
    assert jnp.allclose(out, ref, atol=1e-5, rtol=1e-5)

    # 2) Lane-aligned, multi-tile shape: exercises batch tiling (4 steps),
    #    single-buffered resident weights and triple-buffered x stream.
    B2, in2, hid2, out2 = 512, 128, 256, 128
    x2 = jax.random.normal(kx2, (B2, in2), jnp.float32)
    w1b, w2b = init_mlp_params(kp2, in2, hid2, out2)
    out2_arr = jax.block_until_ready(mlp_forward(x2, w1b, w2b, use_pallas=True))
    assert out2_arr.shape == (B2, out2)
    assert jnp.allclose(out2_arr, mlp_reference(x2, w1b, w2b), atol=1e-4, rtol=1e-4)

    # 2b) Same shape through the bf16 MXU path (f32 accumulation), loose tol.
    out2_bf16 = jax.block_until_ready(
        mlp_forward(x2, w1b, w2b, use_pallas=True, compute_dtype=jnp.bfloat16))
    assert jnp.allclose(out2_bf16, mlp_reference(x2, w1b, w2b), atol=5e-2, rtol=5e-2)

    # 3) Unaligned dims + artificially tiny VMEM budget: exercises feature-dim
    #    padding and the streamed-weights path (hid reduction grid axis, nk > 1).
    B3, in3, hid3, out3 = 256, 100, 1000, 120
    x3 = jax.random.normal(kx3, (B3, in3), jnp.float32)
    w1c, w2c = init_mlp_params(kp3, in3, hid3, out3)
    out3_arr = jax.block_until_ready(
        mlp_forward(x3, w1c, w2c, use_pallas=True, vmem_budget_bytes=1 << 20))
    assert out3_arr.shape == (B3, out3)
    assert jnp.allclose(out3_arr, mlp_reference(x3, w1c, w2c), atol=1e-4, rtol=1e-4)

    print("KERNEL_OK")
</pallas_src>

<mosaic_0001>
module attributes {stable_mosaic.version = 11 : i64} {
  func.func @_mlp_kernel(%arg0: i32, %arg1: i32, %arg2: memref<8x128xf32, #tpu.memory_space<vmem>>, %arg3: memref<128x128xf32, #tpu.memory_space<vmem>>, %arg4: memref<128x128xf32, #tpu.memory_space<vmem>>, %arg5: memref<8x128xf32, #tpu.memory_space<vmem>>, %arg6: memref<8x128xf32, #tpu.memory_space<vmem>>) attributes {dimension_semantics = [#tpu.dimension_semantics<parallel>, #tpu.dimension_semantics<arbitrary>], iteration_bounds = array<i64: 1, 1>, scalar_prefetch = 0 : i64, scratch_operands = 1 : i64, tpu.core_type = #tpu.core_type<tc>, window_params = [{transform_indices = @transform_0, window_bounds = array<i64: 8, 128>}, {pipeline_mode = #tpu.pipeline_mode<synchronous>, transform_indices = @transform_1, window_bounds = array<i64: 128, 128>}, {pipeline_mode = #tpu.pipeline_mode<synchronous>, transform_indices = @transform_2, window_bounds = array<i64: 128, 128>}, {transform_indices = @transform_3, window_bounds = array<i64: 8, 128>}]} {
    %c0_i32 = arith.constant 0 : i32
    %0 = arith.cmpi eq, %arg1, %c0_i32 : i32
    %1 = arith.extui %0 : i1 to i32
    %c0_i32_0 = arith.constant 0 : i32
    %2 = arith.cmpi ne, %1, %c0_i32_0 : i32
    scf.if %2 {
      %cst_14 = arith.constant 0.000000e+00 : f32
      %16 = vector.broadcast %cst_14 : f32 to vector<8x128xf32>
      %c0_15 = arith.constant 0 : index
      %c0_16 = arith.constant 0 : index
      %17 = vector.load %arg6[%c0_15, %c0_16] : memref<8x128xf32, #tpu.memory_space<vmem>>, vector<8x128xf32>
      tpu.vector_store %arg6[%c0_15, %c0_16], %16 {strides = array<i32>} : memref<8x128xf32, #tpu.memory_space<vmem>>, vector<8x128xf32>,
    } else {
    }
    %c0 = arith.constant 0 : index
    %c0_1 = arith.constant 0 : index
    %3 = vector.load %arg2[%c0, %c0_1] : memref<8x128xf32, #tpu.memory_space<vmem>>, vector<8x128xf32>
    %c0_2 = arith.constant 0 : index
    %c0_3 = arith.constant 0 : index
    %4 = vector.load %arg3[%c0_2, %c0_3] : memref<128x128xf32, #tpu.memory_space<vmem>>, vector<128x128xf32>
    %cst = arith.constant dense<0.000000e+00> : vector<8x128xf32>
    %5 = tpu.matmul %3, %4, %cst {dimension_numbers = #tpu.dot_dimension_numbers<[1], [0], [0], [1], [0, 0, 1, 1], [], []>} : vector<8x128xf32>, vector<128x128xf32>, vector<8x128xf32> -> vector<8x128xf32>
    %cst_4 = arith.constant 0.000000e+00 : f32
    %6 = vector.broadcast %cst_4 : f32 to vector<8x128xf32>
    %7 = arith.maximumf %5, %6 : vector<8x128xf32>
    %c0_5 = arith.constant 0 : index
    %c0_6 = arith.constant 0 : index
    %8 = vector.load %arg6[%c0_5, %c0_6] : memref<8x128xf32, #tpu.memory_space<vmem>>, vector<8x128xf32>
    %c0_7 = arith.constant 0 : index
    %c0_8 = arith.constant 0 : index
    %9 = vector.load %arg4[%c0_7, %c0_8] : memref<128x128xf32, #tpu.memory_space<vmem>>, vector<128x128xf32>
    %cst_9 = arith.constant dense<0.000000e+00> : vector<8x128xf32>
    %10 = tpu.matmul %7, %9, %cst_9 {dimension_numbers = #tpu.dot_dimension_numbers<[1], [0], [0], [1], [0, 0, 1, 1], [], []>} : vector<8x128xf32>, vector<128x128xf32>, vector<8x128xf32> -> vector<8x128xf32>
    %11 = arith.addf %8, %10 : vector<8x128xf32>
    %c0_10 = arith.constant 0 : index
    %c0_11 = arith.constant 0 : index
    %12 = vector.load %arg6[%c0_10, %c0_11] : memref<8x128xf32, #tpu.memory_space<vmem>>, vector<8x128xf32>
    tpu.vector_store %arg6[%c0_10, %c0_11], %11 {strides = array<i32>} : memref<8x128xf32, #tpu.memory_space<vmem>>, vector<8x128xf32>,
    %c0_i32_12 = arith.constant 0 : i32
    %13 = arith.cmpi eq, %arg1, %c0_i32_12 : i32
    %14 = arith.extui %13 : i1 to i32
    %c0_i32_13 = arith.constant 0 : i32
    %15 = arith.cmpi ne, %14, %c0_i32_13 : i32
    scf.if %15 {
      %c0_14 = arith.constant 0 : index
      %c0_15 = arith.constant 0 : index
      %16 = vector.load %arg6[%c0_14, %c0_15] : memref<8x128xf32, #tpu.memory_space<vmem>>, vector<8x128xf32>
      %c0_16 = arith.constant 0 : index
      %c0_17 = arith.constant 0 : index
      %17 = vector.load %arg5[%c0_16, %c0_17] : memref<8x128xf32, #tpu.memory_space<vmem>>, vector<8x128xf32>
      tpu.vector_store %arg5[%c0_16, %c0_17], %16 {strides = array<i32>} : memref<8x128xf32, #tpu.memory_space<vmem>>, vector<8x128xf32>,
    } else {
    }
    return
  }
  func.func @transform_0(%arg0: i32, %arg1: i32) -> (i32, i32) {
    %c0_i32 = arith.constant 0 : i32
    %c0_i32_0 = arith.constant 0 : i32
    return %arg0, %c0_i32 : i32, i32
  }
  func.func @transform_1(%arg0: i32, %arg1: i32) -> (i32, i32) {
    %c0_i32 = arith.constant 0 : i32
    %c0_i32_0 = arith.constant 0 : i32
    return %c0_i32, %arg1 : i32, i32
  }
  func.func @transform_2(%arg0: i32, %arg1: i32) -> (i32, i32) {
    %c0_i32 = arith.constant 0 : i32
    %c0_i32_0 = arith.constant 0 : i32
    return %arg1, %c0_i32 : i32, i32
  }
  func.func @transform_3(%arg0: i32, %arg1: i32) -> (i32, i32) {
    %c0_i32 = arith.constant 0 : i32
    %c0_i32_0 = arith.constant 0 : i32
    return %arg0, %c0_i32 : i32, i32
  }
}

module attributes {stable_mosaic.version = 11 : i64} {
  func.func @_mlp_kernel(%arg0: i32, %arg1: i32, %arg2: memref<8x128xf32, #tpu.memory_space<vmem>>, %arg3: memref<128x128xf32, #tpu.memory_space<vmem>>, %arg4: memref<128x128xf32, #tpu.memory_space<vmem>>, %arg5: memref<8x128xf32, #tpu.memory_space<vmem>>, %arg6: memref<8x128xf32, #tpu.memory_space<vmem>>) attributes {dimension_semantics = [#tpu.dimension_semantics<parallel>, #tpu.dimension_semantics<arbitrary>], iteration_bounds = array<i64: 1, 1>, scalar_prefetch = 0 : i64, scratch_operands = 1 : i64, tpu.core_type = #tpu.core_type<tc>, window_params = [{transform_indices = @transform_0, window_bounds = array<i64: 8, 128>}, {transform_indices = @transform_1, window_bounds = array<i64: 128, 128>}, {transform_indices = @transform_2, window_bounds = array<i64: 128, 128>}, {transform_indices = @transform_3, window_bounds = array<i64: 8, 128>}]} {
    %c0_i32 = arith.constant 0 : i32
    %0 = arith.cmpi eq, %arg1, %c0_i32 : i32
    %1 = arith.extui %0 : i1 to i32
    %c0_i32_0 = arith.constant 0 : i32
    %2 = arith.cmpi ne, %1, %c0_i32_0 : i32
    scf.if %2 {
      %cst_14 = arith.constant 0.000000e+00 : f32
      %16 = vector.broadcast %cst_14 : f32 to vector<8x128xf32>
      %c0_15 = arith.constant 0 : index
      %c0_16 = arith.constant 0 : index
      %17 = vector.load %arg6[%c0_15, %c0_16] : memref<8x128xf32, #tpu.memory_space<vmem>>, vector<8x128xf32>
      tpu.vector_store %arg6[%c0_15, %c0_16], %16 {strides = array<i32>} : memref<8x128xf32, #tpu.memory_space<vmem>>, vector<8x128xf32>,
    } else {
    }
    %c0 = arith.constant 0 : index
    %c0_1 = arith.constant 0 : index
    %3 = vector.load %arg2[%c0, %c0_1] : memref<8x128xf32, #tpu.memory_space<vmem>>, vector<8x128xf32>
    %c0_2 = arith.constant 0 : index
    %c0_3 = arith.constant 0 : index
    %4 = vector.load %arg3[%c0_2, %c0_3] : memref<128x128xf32, #tpu.memory_space<vmem>>, vector<128x128xf32>
    %cst = arith.constant dense<0.000000e+00> : vector<8x128xf32>
    %5 = tpu.matmul %3, %4, %cst {dimension_numbers = #tpu.dot_dimension_numbers<[1], [0], [0], [1], [0, 0, 1, 1], [], []>} : vector<8x128xf32>, vector<128x128xf32>, vector<8x128xf32> -> vector<8x128xf32>
    %cst_4 = arith.constant 0.000000e+00 : f32
    %6 = vector.broadcast %cst_4 : f32 to vector<8x128xf32>
    %7 = arith.maximumf %5, %6 : vector<8x128xf32>
    %c0_5 = arith.constant 0 : index
    %c0_6 = arith.constant 0 : index
    %8 = vector.load %arg6[%c0_5, %c0_6] : memref<8x128xf32, #tpu.memory_space<vmem>>, vector<8x128xf32>
    %c0_7 = arith.constant 0 : index
    %c0_8 = arith.constant 0 : index
    %9 = vector.load %arg4[%c0_7, %c0_8] : memref<128x128xf32, #tpu.memory_space<vmem>>, vector<128x128xf32>
    %cst_9 = arith.constant dense<0.000000e+00> : vector<8x128xf32>
    %10 = tpu.matmul %7, %9, %cst_9 {dimension_numbers = #tpu.dot_dimension_numbers<[1], [0], [0], [1], [0, 0, 1, 1], [], []>} : vector<8x128xf32>, vector<128x128xf32>, vector<8x128xf32> -> vector<8x128xf32>
    %11 = arith.addf %8, %10 : vector<8x128xf32>
    %c0_10 = arith.constant 0 : index
    %c0_11 = arith.constant 0 : index
    %12 = vector.load %arg6[%c0_10, %c0_11] : memref<8x128xf32, #tpu.memory_space<vmem>>, vector<8x128xf32>
    tpu.vector_store %arg6[%c0_10, %c0_11], %11 {strides = array<i32>} : memref<8x128xf32, #tpu.memory_space<vmem>>, vector<8x128xf32>,
    %c0_i32_12 = arith.constant 0 : i32
    %13 = arith.cmpi eq, %arg1, %c0_i32_12 : i32
    %14 = arith.extui %13 : i1 to i32
    %c0_i32_13 = arith.constant 0 : i32
    %15 = arith.cmpi ne, %14, %c0_i32_13 : i32
    scf.if %15 {
      %c0_14 = arith.constant 0 : index
      %c0_15 = arith.constant 0 : index
      %16 = vector.load %arg6[%c0_14, %c0_15] : memref<8x128xf32, #tpu.memory_space<vmem>>, vector<8x128xf32>
      %c0_16 = arith.constant 0 : index
      %c0_17 = arith.constant 0 : index
      %17 = vector.load %arg5[%c0_16, %c0_17] : memref<8x128xf32, #tpu.memory_space<vmem>>, vector<8x128xf32>
      tpu.vector_store %arg5[%c0_16, %c0_17], %16 {strides = array<i32>} : memref<8x128xf32, #tpu.memory_space<vmem>>, vector<8x128xf32>,
    } else {
    }
    return
  }
  func.func @transform_0(%arg0: i32, %arg1: i32) -> (i32, i32) {
    %c0_i32 = arith.constant 0 : i32
    %c0_i32_0 = arith.constant 0 : i32
    return %arg0, %c0_i32 : i32, i32
  }
  func.func @transform_1(%arg0: i32, %arg1: i32) -> (i32, i32) {
    %c0_i32 = arith.constant 0 : i32
    %c0_i32_0 = arith.constant 0 : i32
    return %c0_i32, %arg1 : i32, i32
  }
  func.func @transform_2(%arg0: i32, %arg1: i32) -> (i32, i32) {
    %c0_i32 = arith.constant 0 : i32
    %c0_i32_0 = arith.constant 0 : i32
    return %arg1, %c0_i32 : i32, i32
  }
  func.func @transform_3(%arg0: i32, %arg1: i32) -> (i32, i32) {
    %c0_i32 = arith.constant 0 : i32
    %c0_i32_0 = arith.constant 0 : i32
    return %arg0, %c0_i32 : i32, i32
  }
}

</mosaic_0001>

<llo_original>
// kernel: tpu_custom_call.1
$region0: #{tpu_custom_call.1}
  #allocation0 [shape = 'u32[]', space=smem, size = 0x4, offset = 0x4, fixed_abs, tag = 'smem constant byte address 0x4 - core index']
  #allocation1 [shape = 'u32[144,128]{1,0:T(1,128)}', space=vmem, size = 0x12000, scoped, tag = 'internal scratch']
  #allocation2 [shape = 'f32[8,128]{1,0:T(8,128)}', space=vmem, size = 0x1000, scoped, tag = 'scratch operand']
  %s0 = inlined_call_operand.hbm [shape: f32[8,128], index: 0, kind: input, shape index: {}]
  %s1 = inlined_call_operand.hbm [shape: f32[128,128], index: 1, kind: input, shape index: {}]
  %s2 = inlined_call_operand.hbm [shape: f32[128,128], index: 2, kind: input, shape index: {}]
  %s3 = inlined_call_operand.hbm [shape: f32[8,128], index: 3, kind: output, shape index: {}]
  %s4 = sld [smem:[#allocation0]]
  $region42: #{tpu_custom_call.1} parent=0
    _
  %s6 = ssub.s32 1, %s4
  %s7 = scalar_select 0, %s6, %s4
  $region1: #{tpu_custom_call.1} parent=0
    #allocation3 [shape = 'u8[4096]{0}', space=vmem, size = 0x1000, scoped, tag = 'input window, operand 0, single buffered']
    #allocation4 [shape = 's32[1]{0}', space=sflag, size = 0x4, scoped, tag = 'scoped memory for tpu_custom_call.1']
    #allocation5 [shape = 's32[1]{0}', space=sflag, size = 0x4, scoped, tag = 'scoped memory for tpu_custom_call.1']
    #allocation6 [shape = 'u8[65536]{0}', space=vmem, size = 0x10000, scoped, tag = 'input window, operand 1, single buffered']
    #allocation7 [shape = 's32[1]{0}', space=sflag, size = 0x4, scoped, tag = 'scoped memory for tpu_custom_call.1']
    #allocation8 [shape = 'u8[65536]{0}', space=vmem, size = 0x10000, scoped, tag = 'input window, operand 2, single buffered']
    #allocation9 [shape = 'u8[4096]{0}', space=vmem, size = 0x1000, scoped, tag = 'output window, operand 0, single buffered']
    %8 = vsyncpa [#allocation4], 0
    %9 = vsyncpa [#allocation7], 0
    %10 = vsyncpa [#allocation5], 0
    // Predicated region
    $region2: #{tpu_custom_call.1} parent=1 // pred_check
      _
    $region3: #{tpu_custom_call.1} parent=1 // pred_check_branch
      %12 = sbr.rel (0) target = $region5
    $region4: #{tpu_custom_call.1} parent=1 // pred_region
      %s14 = ssub.s32 128, 128
      %15 = vsyncadd [#allocation4], %s14
      %s17 = sshll.u32 [#allocation3], 4
      %s18 = int_to_ptr.vmem [resolvable:$true] %s17
      %20 = dma.hbm_to_vmem [thread:$0]  %s0, 128, %s18, [#allocation4]
    $region5: #{tpu_custom_call.1} parent=1 // pred_fallthru
      _
    // Predicated region
    $region6: #{tpu_custom_call.1} parent=1 // pred_check
      _
    $region7: #{tpu_custom_call.1} parent=1 // pred_check_branch
      %22 = sbr.rel (0) target = $region9
    $region8: #{tpu_custom_call.1} parent=1 // pred_region
      %s24 = ssub.s32 2048, 2048
      %25 = vsyncadd [#allocation7], %s24
      %s26 = sshll.u32 [#allocation6], 4
      %s27 = int_to_ptr.vmem [resolvable:$true] %s26
      %32 = dma.hbm_to_vmem [thread:$0]  %s1, 2048, %s27, [#allocation7], 128, 128, 8
    $region9: #{tpu_custom_call.1} parent=1 // pred_fallthru
      _
    // Predicated region
    $region10: #{tpu_custom_call.1} parent=1 // pred_check
      _
    $region11: #{tpu_custom_call.1} parent=1 // pred_check_branch
      %34 = sbr.rel (0) target = $region13
    $region12: #{tpu_custom_call.1} parent=1 // pred_region
      %s36 = ssub.s32 2048, 2048
      %37 = vsyncadd [#allocation7], %s36
      %s38 = sshll.u32 [#allocation8], 4
      %s39 = int_to_ptr.vmem [resolvable:$true] %s38
      %44 = dma.hbm_to_vmem [thread:$0]  %s2, 2048, %s39, [#allocation7], 128, 128, 8
    $region13: #{tpu_custom_call.1} parent=1 // pred_fallthru
      _
    // Predicated region
    $region14: #{tpu_custom_call.1} parent=1 // pred_check
      _
    $region15: #{tpu_custom_call.1} parent=1 // pred_check_branch
      %46 = sbr.rel (0) target = $region17
    $region16: #{tpu_custom_call.1} parent=1 // pred_region
      %47 = dma.done [#allocation4], 128
    $region17: #{tpu_custom_call.1} parent=1 // pred_fallthru
      _
    // Predicated region
    $region18: #{tpu_custom_call.1} parent=1 // pred_check
      _
    $region19: #{tpu_custom_call.1} parent=1 // pred_check_branch
      %49 = sbr.rel (0) target = $region21
    $region20: #{tpu_custom_call.1} parent=1 // pred_region
      %50 = dma.done [#allocation7], 2048
    $region21: #{tpu_custom_call.1} parent=1 // pred_fallthru
      _
    // Predicated region
    $region22: #{tpu_custom_call.1} parent=1 // pred_check
      _
    $region23: #{tpu_custom_call.1} parent=1 // pred_check_branch
      %52 = sbr.rel (0) target = $region25
    $region24: #{tpu_custom_call.1} parent=1 // pred_region
      %53 = dma.done [#allocation7], 2048
    $region25: #{tpu_custom_call.1} parent=1 // pred_fallthru
      _
    %p54 = scmp.eq.s32.totalorder 0, 0
    // Predicated region
    $region26: #{tpu_custom_call.1} parent=1 // pred_check
      %p55 = pneg %p54
    $region27: #{tpu_custom_call.1} parent=1 // pred_check_branch
      %57 = sbr.rel (%p55) target = $region29
    $region28: #{tpu_custom_call.1} parent=1 // pred_region
      %58 = vst [vmem:[#allocation2] sm:$0xff] 0.0
    $region29: #{tpu_custom_call.1} parent=1 // pred_fallthru
      _
    %v59 = vld [vmem:[#allocation3] sm:$0xff]
    %v60 = vld [vmem:[#allocation6] sm:$0xff]
    %v61 = vld [vmem:[#allocation6 + $0x8] sm:$0xff]
    %v62 = vld [vmem:[#allocation6 + $0x10] sm:$0xff]
    %v63 = vld [vmem:[#allocation6 + $0x18] sm:$0xff]
    %v64 = vld [vmem:[#allocation6 + $0x20] sm:$0xff]
    %v65 = vld [vmem:[#allocation6 + $0x28] sm:$0xff]
    %v66 = vld [vmem:[#allocation6 + $0x30] sm:$0xff]
    %v67 = vld [vmem:[#allocation6 + $0x38] sm:$0xff]
    %v68 = vld [vmem:[#allocation6 + $0x40] sm:$0xff]
    %v69 = vld [vmem:[#allocation6 + $0x48] sm:$0xff]
    %v70 = vld [vmem:[#allocation6 + $0x50] sm:$0xff]
    %v71 = vld [vmem:[#allocation6 + $0x58] sm:$0xff]
    %v72 = vld [vmem:[#allocation6 + $0x60] sm:$0xff]
    %v73 = vld [vmem:[#allocation6 + $0x68] sm:$0xff]
    %v74 = vld [vmem:[#allocation6 + $0x70] sm:$0xff]
    %v75 = vld [vmem:[#allocation6 + $0x78] sm:$0xff]
    %76 = vmatprep.subr.mxu0 0.0
    %77 = vmatpush1.msra.mxu0 %v60
    %78 = vmatprep.subr.mxu0 0.0
    %79 = vmatpush1.msra.mxu0 %v61
    %80 = vmatprep.subr.mxu0 0.0
    %81 = vmatpush1.msra.mxu0 %v62
    %82 = vmatprep.subr.mxu0 0.0
    %83 = vmatpush1.msra.mxu0 %v63
    %84 = vmatprep.subr.mxu0 0.0
    %85 = vmatpush1.msra.mxu0 %v64
    %86 = vmatprep.subr.mxu0 0.0
    %87 = vmatpush1.msra.mxu0 %v65
    %88 = vmatprep.subr.mxu0 0.0
    %89 = vmatpush1.msra.mxu0 %v66
    %90 = vmatprep.subr.mxu0 0.0
    %91 = vmatpush1.msra.mxu0 %v67
    %92 = vmatprep.subr.mxu0 0.0
    %93 = vmatpush1.msra.mxu0 %v68
    %94 = vmatprep.subr.mxu0 0.0
    %95 = vmatpush1.msra.mxu0 %v69
    %96 = vmatprep.subr.mxu0 0.0
    %97 = vmatpush1.msra.mxu0 %v70
    %98 = vmatprep.subr.mxu0 0.0
    %99 = vmatpush1.msra.mxu0 %v71
    %100 = vmatprep.subr.mxu0 0.0
    %101 = vmatpush1.msra.mxu0 %v72
    %102 = vmatprep.subr.mxu0 0.0
    %103 = vmatpush1.msra.mxu0 %v73
    %104 = vmatprep.subr.mxu0 0.0
    %105 = vmatpush1.msra.mxu0 %v74
    %106 = vmatprep.subr.mxu0 0.0
    %107 = vmatpush1.msra.mxu0 %v75
    %108 = vmatprep.subr.mxu0 0.0
    %109 = vmatpush1.msra.mxu0 0.0
    %110 = vmatprep.subr.mxu0 0.0
    %111 = vmatpush1.msra.mxu0 0.0
    %112 = vmatprep.subr.mxu0 0.0
    %113 = vmatpush1.msra.mxu0 0.0
    %114 = vmatprep.subr.mxu0 0.0
    %115 = vmatpush1.msra.mxu0 0.0
    %116 = vmatprep.subr.mxu0 0.0
    %117 = vmatpush1.msra.mxu0 0.0
    %118 = vmatprep.subr.mxu0 0.0
    %119 = vmatpush1.msra.mxu0 0.0
    %120 = vmatprep.subr.mxu0 0.0
    %121 = vmatpush1.msra.mxu0 0.0
    %122 = vmatprep.subr.mxu0 0.0
    %123 = vmatpush1.msra.mxu0 0.0
    %124 = vmatprep.subr.mxu0 0.0
    %125 = vmatpush1.msra.mxu0 0.0
    %126 = vmatprep.subr.mxu0 0.0
    %127 = vmatpush1.msra.mxu0 0.0
    %128 = vmatprep.subr.mxu0 0.0
    %129 = vmatpush1.msra.mxu0 0.0
    %130 = vmatprep.subr.mxu0 0.0
    %131 = vmatpush1.msra.mxu0 0.0
    %132 = vmatprep.subr.mxu0 0.0
    %133 = vmatpush1.msra.mxu0 0.0
    %134 = vmatprep.subr.mxu0 0.0
    %135 = vmatpush1.msra.mxu0 0.0
    %136 = vmatprep.subr.mxu0 0.0
    %137 = vmatpush1.msra.mxu0 0.0
    %138 = vmatprep.subr.mxu0 0.0
    %139 = vmatpush1.msra.mxu0 0.0
    %140 = vmatprep.mubr.f32.mxu0 0.0
    %141 = vmatmul.mubr.f32.gmra.mrb[0].mxu0 %v59
    %v142 = vpop.f32.mrb[0].mxu0
    %v143 = vadd.f32 0.0, %v142
    %v144 = vpop.f32.mrb[0].mxu0
    %145 = vdwg.mxu0
    %v146 = vmax.f32 %v143, 0.0
    %v147 = vld [vmem:[#allocation2] sm:$0xff]
    %v148 = vld [vmem:[#allocation8] sm:$0xff]
    %v149 = vld [vmem:[#allocation8 + $0x8] sm:$0xff]
    %v150 = vld [vmem:[#allocation8 + $0x10] sm:$0xff]
    %v151 = vld [vmem:[#allocation8 + $0x18] sm:$0xff]
    %v152 = vld [vmem:[#allocation8 + $0x20] sm:$0xff]
    %v153 = vld [vmem:[#allocation8 + $0x28] sm:$0xff]
    %v154 = vld [vmem:[#allocation8 + $0x30] sm:$0xff]
    %v155 = vld [vmem:[#allocation8 + $0x38] sm:$0xff]
    %v156 = vld [vmem:[#allocation8 + $0x40] sm:$0xff]
    %v157 = vld [vmem:[#allocation8 + $0x48] sm:$0xff]
    %v158 = vld [vmem:[#allocation8 + $0x50] sm:$0xff]
    %v159 = vld [vmem:[#allocation8 + $0x58] sm:$0xff]
    %v160 = vld [vmem:[#allocation8 + $0x60] sm:$0xff]
    %v161 = vld [vmem:[#allocation8 + $0x68] sm:$0xff]
    %v162 = vld [vmem:[#allocation8 + $0x70] sm:$0xff]
    %v163 = vld [vmem:[#allocation8 + $0x78] sm:$0xff]
    %164 = vmatprep.subr.mxu0 0.0
    %165 = vmatpush1.msra.mxu0 %v148
    %166 = vmatprep.subr.mxu0 0.0
    %167 = vmatpush1.msra.mxu0 %v149
    %168 = vmatprep.subr.mxu0 0.0
    %169 = vmatpush1.msra.mxu0 %v150
    %170 = vmatprep.subr.mxu0 0.0
    %171 = vmatpush1.msra.mxu0 %v151
    %172 = vmatprep.subr.mxu0 0.0
    %173 = vmatpush1.msra.mxu0 %v152
    %174 = vmatprep.subr.mxu0 0.0
    %175 = vmatpush1.msra.mxu0 %v153
    %176 = vmatprep.subr.mxu0 0.0
    %177 = vmatpush1.msra.mxu0 %v154
    %178 = vmatprep.subr.mxu0 0.0
    %179 = vmatpush1.msra.mxu0 %v155
    %180 = vmatprep.subr.mxu0 0.0
    %181 = vmatpush1.msra.mxu0 %v156
    %182 = vmatprep.subr.mxu0 0.0
    %183 = vmatpush1.msra.mxu0 %v157
    %184 = vmatprep.subr.mxu0 0.0
    %185 = vmatpush1.msra.mxu0 %v158
    %186 = vmatprep.subr.mxu0 0.0
    %187 = vmatpush1.msra.mxu0 %v159
    %188 = vmatprep.subr.mxu0 0.0
    %189 = vmatpush1.msra.mxu0 %v160
    %190 = vmatprep.subr.mxu0 0.0
    %191 = vmatpush1.msra.mxu0 %v161
    %192 = vmatprep.subr.mxu0 0.0
    %193 = vmatpush1.msra.mxu0 %v162
    %194 = vmatprep.subr.mxu0 0.0
    %195 = vmatpush1.msra.mxu0 %v163
    %196 = vmatprep.subr.mxu0 0.0
    %197 = vmatpush1.msra.mxu0 0.0
    %198 = vmatprep.subr.mxu0 0.0
    %199 = vmatpush1.msra.mxu0 0.0
    %200 = vmatprep.subr.mxu0 0.0
    %201 = vmatpush1.msra.mxu0 0.0
    %202 = vmatprep.subr.mxu0 0.0
    %203 = vmatpush1.msra.mxu0 0.0
    %204 = vmatprep.subr.mxu0 0.0
    %205 = vmatpush1.msra.mxu0 0.0
    %206 = vmatprep.subr.mxu0 0.0
    %207 = vmatpush1.msra.mxu0 0.0
    %208 = vmatprep.subr.mxu0 0.0
    %209 = vmatpush1.msra.mxu0 0.0
    %210 = vmatprep.subr.mxu0 0.0
    %211 = vmatpush1.msra.mxu0 0.0
    %212 = vmatprep.subr.mxu0 0.0
    %213 = vmatpush1.msra.mxu0 0.0
    %214 = vmatprep.subr.mxu0 0.0
    %215 = vmatpush1.msra.mxu0 0.0
    %216 = vmatprep.subr.mxu0 0.0
    %217 = vmatpush1.msra.mxu0 0.0
    %218 = vmatprep.subr.mxu0 0.0
    %219 = vmatpush1.msra.mxu0 0.0
    %220 = vmatprep.subr.mxu0 0.0
    %221 = vmatpush1.msra.mxu0 0.0
    %222 = vmatprep.subr.mxu0 0.0
    %223 = vmatpush1.msra.mxu0 0.0
    %224 = vmatprep.subr.mxu0 0.0
    %225 = vmatpush1.msra.mxu0 0.0
    %226 = vmatprep.subr.mxu0 0.0
    %227 = vmatpush1.msra.mxu0 0.0
    %228 = vmatprep.mubr.f32.mxu0 0.0
    %229 = vmatmul.mubr.f32.gmra.mrb[0].mxu0 %v146
    %v230 = vpop.f32.mrb[0].mxu0
    %v231 = vadd.f32 0.0, %v230
    %v232 = vpop.f32.mrb[0].mxu0
    %233 = vdwg.mxu0
    %v234 = vadd.f32 %v147, %v231
    %235 = vst [vmem:[#allocation2] sm:$0xff] %v234
    // Predicated region
    $region30: #{tpu_custom_call.1} parent=1 // pred_check
      %p236 = pneg %p54
    $region31: #{tpu_custom_call.1} parent=1 // pred_check_branch
      %238 = sbr.rel (%p236) target = $region33
    $region32: #{tpu_custom_call.1} parent=1 // pred_region
      %v239 = vld [vmem:[#allocation2] sm:$0xff]
      %240 = vst [vmem:[#allocation9] sm:$0xff] %v239
    $region33: #{tpu_custom_call.1} parent=1 // pred_fallthru
      _
    // Predicated region
    $region34: #{tpu_custom_call.1} parent=1 // pred_check
      _
    $region35: #{tpu_custom_call.1} parent=1 // pred_check_branch
      %242 = sbr.rel (0) target = $region37
    $region36: #{tpu_custom_call.1} parent=1 // pred_region
      %s244 = ssub.s32 128, 128
      %245 = vsyncadd [#allocation5], %s244
      %s247 = sshll.u32 [#allocation9], 4
      %s248 = int_to_ptr.vmem [resolvable:$true] %s247
      %250 = dma.vmem_to_hbm [thread:$0]  %s248, 128, %s3, [#allocation5]
    $region37: #{tpu_custom_call.1} parent=1 // pred_fallthru
      _
    // Predicated region
    $region38: #{tpu_custom_call.1} parent=1 // pred_check
      _
    $region39: #{tpu_custom_call.1} parent=1 // pred_check_branch
      %252 = sbr.rel (0) target = $region41
    $region40: #{tpu_custom_call.1} parent=1 // pred_region
      %253 = dma.done [#allocation5], 128
    $region41: #{tpu_custom_call.1} parent=1 // pred_fallthru
      _
    %254 = vsyncpa [#allocation4], 1
    %255 = vsyncpa [#allocation7], 1
    %256 = vsyncpa [#allocation5], 1

// kernel: tpu_custom_call.1
$region0: #{tpu_custom_call.1}
  #allocation0 [shape = 'u32[]', space=smem, size = 0x4, offset = 0x4, fixed_abs, tag = 'smem constant byte address 0x4 - core index']
  #allocation1 [shape = 'u32[144,128]{1,0:T(1,128)}', space=vmem, size = 0x12000, scoped, tag = 'internal scratch']
  #allocation2 [shape = 'f32[8,128]{1,0:T(8,128)}', space=vmem, size = 0x1000, scoped, tag = 'scratch operand']
  %s0 = inlined_call_operand.hbm [shape: f32[8,128], index: 0, kind: input, shape index: {}]
  %s1 = inlined_call_operand.hbm [shape: f32[128,128], index: 1, kind: input, shape index: {}]
  %s2 = inlined_call_operand.hbm [shape: f32[128,128], index: 2, kind: input, shape index: {}]
  %s3 = inlined_call_operand.hbm [shape: f32[8,128], index: 3, kind: output, shape index: {}]
  %s4 = sld [smem:[#allocation0]]
  $region42: #{tpu_custom_call.1} parent=0
    _
  %s6 = ssub.s32 1, %s4
  %s7 = scalar_select 0, %s6, %s4
  $region1: #{tpu_custom_call.1} parent=0
    #allocation3 [shape = 'u8[4096]{0}', space=vmem, size = 0x1000, scoped, tag = 'input window, operand 0, single buffered']
    #allocation4 [shape = 's32[1]{0}', space=sflag, size = 0x4, scoped, tag = 'scoped memory for tpu_custom_call.1']
    #allocation5 [shape = 's32[1]{0}', space=sflag, size = 0x4, scoped, tag = 'scoped memory for tpu_custom_call.1']
    #allocation6 [shape = 'u8[65536]{0}', space=vmem, size = 0x10000, scoped, tag = 'input window, operand 1, single buffered']
    #allocation7 [shape = 's32[1]{0}', space=sflag, size = 0x4, scoped, tag = 'scoped memory for tpu_custom_call.1']
    #allocation8 [shape = 'u8[65536]{0}', space=vmem, size = 0x10000, scoped, tag = 'input window, operand 2, single buffered']
    #allocation9 [shape = 'u8[4096]{0}', space=vmem, size = 0x1000, scoped, tag = 'output window, operand 0, single buffered']
    %8 = vsyncpa [#allocation4], 0
    %9 = vsyncpa [#allocation7], 0
    %10 = vsyncpa [#allocation5], 0
    // Predicated region
    $region2: #{tpu_custom_call.1} parent=1 // pred_check
      _
    $region3: #{tpu_custom_call.1} parent=1 // pred_check_branch
      %12 = sbr.rel (0) target = $region5
    $region4: #{tpu_custom_call.1} parent=1 // pred_region
      %s14 = ssub.s32 128, 128
      %15 = vsyncadd [#allocation4], %s14
      %s17 = sshll.u32 [#allocation3], 4
      %s18 = int_to_ptr.vmem [resolvable:$true] %s17
      %20 = dma.hbm_to_vmem [thread:$0]  %s0, 128, %s18, [#allocation4]
    $region5: #{tpu_custom_call.1} parent=1 // pred_fallthru
      _
    // Predicated region
    $region6: #{tpu_custom_call.1} parent=1 // pred_check
      _
    $region7: #{tpu_custom_call.1} parent=1 // pred_check_branch
      %22 = sbr.rel (0) target = $region9
    $region8: #{tpu_custom_call.1} parent=1 // pred_region
      %s24 = ssub.s32 2048, 2048
      %25 = vsyncadd [#allocation7], %s24
      %s26 = sshll.u32 [#allocation6], 4
      %s27 = int_to_ptr.vmem [resolvable:$true] %s26
      %32 = dma.hbm_to_vmem [thread:$0]  %s1, 2048, %s27, [#allocation7], 128, 128, 8
    $region9: #{tpu_custom_call.1} parent=1 // pred_fallthru
      _
    // Predicated region
    $region10: #{tpu_custom_call.1} parent=1 // pred_check
      _
    $region11: #{tpu_custom_call.1} parent=1 // pred_check_branch
      %34 = sbr.rel (0) target = $region13
    $region12: #{tpu_custom_call.1} parent=1 // pred_region
      %s36 = ssub.s32 2048, 2048
      %37 = vsyncadd [#allocation7], %s36
      %s38 = sshll.u32 [#allocation8], 4
      %s39 = int_to_ptr.vmem [resolvable:$true] %s38
      %44 = dma.hbm_to_vmem [thread:$0]  %s2, 2048, %s39, [#allocation7], 128, 128, 8
    $region13: #{tpu_custom_call.1} parent=1 // pred_fallthru
      _
    // Predicated region
    $region14: #{tpu_custom_call.1} parent=1 // pred_check
      _
    $region15: #{tpu_custom_call.1} parent=1 // pred_check_branch
      %46 = sbr.rel (0) target = $region17
    $region16: #{tpu_custom_call.1} parent=1 // pred_region
      %47 = dma.done [#allocation4], 128
    $region17: #{tpu_custom_call.1} parent=1 // pred_fallthru
      _
    // Predicated region
    $region18: #{tpu_custom_call.1} parent=1 // pred_check
      _
    $region19: #{tpu_custom_call.1} parent=1 // pred_check_branch
      %49 = sbr.rel (0) target = $region21
    $region20: #{tpu_custom_call.1} parent=1 // pred_region
      %50 = dma.done [#allocation7], 2048
    $region21: #{tpu_custom_call.1} parent=1 // pred_fallthru
      _
    // Predicated region
    $region22: #{tpu_custom_call.1} parent=1 // pred_check
      _
    $region23: #{tpu_custom_call.1} parent=1 // pred_check_branch
      %52 = sbr.rel (0) target = $region25
    $region24: #{tpu_custom_call.1} parent=1 // pred_region
      %53 = dma.done [#allocation7], 2048
    $region25: #{tpu_custom_call.1} parent=1 // pred_fallthru
      _
    %p54 = scmp.eq.s32.totalorder 0, 0
    // Predicated region
    $region26: #{tpu_custom_call.1} parent=1 // pred_check
      %p55 = pneg %p54
    $region27: #{tpu_custom_call.1} parent=1 // pred_check_branch
      %57 = sbr.rel (%p55) target = $region29
    $region28: #{tpu_custom_call.1} parent=1 // pred_region
      %58 = vst [vmem:[#allocation2] sm:$0xff] 0.0
    $region29: #{tpu_custom_call.1} parent=1 // pred_fallthru
      _
    %v59 = vld [vmem:[#allocation3] sm:$0xff]
    %v60 = vld [vmem:[#allocation6] sm:$0xff]
    %v61 = vld [vmem:[#allocation6 + $0x8] sm:$0xff]
    %v62 = vld [vmem:[#allocation6 + $0x10] sm:$0xff]
    %v63 = vld [vmem:[#allocation6 + $0x18] sm:$0xff]
    %v64 = vld [vmem:[#allocation6 + $0x20] sm:$0xff]
    %v65 = vld [vmem:[#allocation6 + $0x28] sm:$0xff]
    %v66 = vld [vmem:[#allocation6 + $0x30] sm:$0xff]
    %v67 = vld [vmem:[#allocation6 + $0x38] sm:$0xff]
    %v68 = vld [vmem:[#allocation6 + $0x40] sm:$0xff]
    %v69 = vld [vmem:[#allocation6 + $0x48] sm:$0xff]
    %v70 = vld [vmem:[#allocation6 + $0x50] sm:$0xff]
    %v71 = vld [vmem:[#allocation6 + $0x58] sm:$0xff]
    %v72 = vld [vmem:[#allocation6 + $0x60] sm:$0xff]
    %v73 = vld [vmem:[#allocation6 + $0x68] sm:$0xff]
    %v74 = vld [vmem:[#allocation6 + $0x70] sm:$0xff]
    %v75 = vld [vmem:[#allocation6 + $0x78] sm:$0xff]
    %76 = vmatprep.subr.mxu0 0.0
    %77 = vmatpush1.msra.mxu0 %v60
    %78 = vmatprep.subr.mxu0 0.0
    %79 = vmatpush1.msra.mxu0 %v61
    %80 = vmatprep.subr.mxu0 0.0
    %81 = vmatpush1.msra.mxu0 %v62
    %82 = vmatprep.subr.mxu0 0.0
    %83 = vmatpush1.msra.mxu0 %v63
    %84 = vmatprep.subr.mxu0 0.0
    %85 = vmatpush1.msra.mxu0 %v64
    %86 = vmatprep.subr.mxu0 0.0
    %87 = vmatpush1.msra.mxu0 %v65
    %88 = vmatprep.subr.mxu0 0.0
    %89 = vmatpush1.msra.mxu0 %v66
    %90 = vmatprep.subr.mxu0 0.0
    %91 = vmatpush1.msra.mxu0 %v67
    %92 = vmatprep.subr.mxu0 0.0
    %93 = vmatpush1.msra.mxu0 %v68
    %94 = vmatprep.subr.mxu0 0.0
    %95 = vmatpush1.msra.mxu0 %v69
    %96 = vmatprep.subr.mxu0 0.0
    %97 = vmatpush1.msra.mxu0 %v70
    %98 = vmatprep.subr.mxu0 0.0
    %99 = vmatpush1.msra.mxu0 %v71
    %100 = vmatprep.subr.mxu0 0.0
    %101 = vmatpush1.msra.mxu0 %v72
    %102 = vmatprep.subr.mxu0 0.0
    %103 = vmatpush1.msra.mxu0 %v73
    %104 = vmatprep.subr.mxu0 0.0
    %105 = vmatpush1.msra.mxu0 %v74
    %106 = vmatprep.subr.mxu0 0.0
    %107 = vmatpush1.msra.mxu0 %v75
    %108 = vmatprep.subr.mxu0 0.0
    %109 = vmatpush1.msra.mxu0 0.0
    %110 = vmatprep.subr.mxu0 0.0
    %111 = vmatpush1.msra.mxu0 0.0
    %112 = vmatprep.subr.mxu0 0.0
    %113 = vmatpush1.msra.mxu0 0.0
    %114 = vmatprep.subr.mxu0 0.0
    %115 = vmatpush1.msra.mxu0 0.0
    %116 = vmatprep.subr.mxu0 0.0
    %117 = vmatpush1.msra.mxu0 0.0
    %118 = vmatprep.subr.mxu0 0.0
    %119 = vmatpush1.msra.mxu0 0.0
    %120 = vmatprep.subr.mxu0 0.0
    %121 = vmatpush1.msra.mxu0 0.0
    %122 = vmatprep.subr.mxu0 0.0
    %123 = vmatpush1.msra.mxu0 0.0
    %124 = vmatprep.subr.mxu0 0.0
    %125 = vmatpush1.msra.mxu0 0.0
    %126 = vmatprep.subr.mxu0 0.0
    %127 = vmatpush1.msra.mxu0 0.0
    %128 = vmatprep.subr.mxu0 0.0
    %129 = vmatpush1.msra.mxu0 0.0
    %130 = vmatprep.subr.mxu0 0.0
    %131 = vmatpush1.msra.mxu0 0.0
    %132 = vmatprep.subr.mxu0 0.0
    %133 = vmatpush1.msra.mxu0 0.0
    %134 = vmatprep.subr.mxu0 0.0
    %135 = vmatpush1.msra.mxu0 0.0
    %136 = vmatprep.subr.mxu0 0.0
    %137 = vmatpush1.msra.mxu0 0.0
    %138 = vmatprep.subr.mxu0 0.0
    %139 = vmatpush1.msra.mxu0 0.0
    %140 = vmatprep.mubr.f32.mxu0 0.0
    %141 = vmatmul.mubr.f32.gmra.mrb[0].mxu0 %v59
    %v142 = vpop.f32.mrb[0].mxu0
    %v143 = vadd.f32 0.0, %v142
    %v144 = vpop.f32.mrb[0].mxu0
    %145 = vdwg.mxu0
    %v146 = vmax.f32 %v143, 0.0
    %v147 = vld [vmem:[#allocation2] sm:$0xff]
    %v148 = vld [vmem:[#allocation8] sm:$0xff]
    %v149 = vld [vmem:[#allocation8 + $0x8] sm:$0xff]
    %v150 = vld [vmem:[#allocation8 + $0x10] sm:$0xff]
    %v151 = vld [vmem:[#allocation8 + $0x18] sm:$0xff]
    %v152 = vld [vmem:[#allocation8 + $0x20] sm:$0xff]
    %v153 = vld [vmem:[#allocation8 + $0x28] sm:$0xff]
    %v154 = vld [vmem:[#allocation8 + $0x30] sm:$0xff]
    %v155 = vld [vmem:[#allocation8 + $0x38] sm:$0xff]
    %v156 = vld [vmem:[#allocation8 + $0x40] sm:$0xff]
    %v157 = vld [vmem:[#allocation8 + $0x48] sm:$0xff]
    %v158 = vld [vmem:[#allocation8 + $0x50] sm:$0xff]
    %v159 = vld [vmem:[#allocation8 + $0x58] sm:$0xff]
    %v160 = vld [vmem:[#allocation8 + $0x60] sm:$0xff]
    %v161 = vld [vmem:[#allocation8 + $0x68] sm:$0xff]
    %v162 = vld [vmem:[#allocation8 + $0x70] sm:$0xff]
    %v163 = vld [vmem:[#allocation8 + $0x78] sm:$0xff]
    %164 = vmatprep.subr.mxu0 0.0
    %165 = vmatpush1.msra.mxu0 %v148
    %166 = vmatprep.subr.mxu0 0.0
    %167 = vmatpush1.msra.mxu0 %v149
    %168 = vmatprep.subr.mxu0 0.0
    %169 = vmatpush1.msra.mxu0 %v150
    %170 = vmatprep.subr.mxu0 0.0
    %171 = vmatpush1.msra.mxu0 %v151
    %172 = vmatprep.subr.mxu0 0.0
    %173 = vmatpush1.msra.mxu0 %v152
    %174 = vmatprep.subr.mxu0 0.0
    %175 = vmatpush1.msra.mxu0 %v153
    %176 = vmatprep.subr.mxu0 0.0
    %177 = vmatpush1.msra.mxu0 %v154
    %178 = vmatprep.subr.mxu0 0.0
    %179 = vmatpush1.msra.mxu0 %v155
    %180 = vmatprep.subr.mxu0 0.0
    %181 = vmatpush1.msra.mxu0 %v156
    %182 = vmatprep.subr.mxu0 0.0
    %183 = vmatpush1.msra.mxu0 %v157
    %184 = vmatprep.subr.mxu0 0.0
    %185 = vmatpush1.msra.mxu0 %v158
    %186 = vmatprep.subr.mxu0 0.0
    %187 = vmatpush1.msra.mxu0 %v159
    %188 = vmatprep.subr.mxu0 0.0
    %189 = vmatpush1.msra.mxu0 %v160
    %190 = vmatprep.subr.mxu0 0.0
    %191 = vmatpush1.msra.mxu0 %v161
    %192 = vmatprep.subr.mxu0 0.0
    %193 = vmatpush1.msra.mxu0 %v162
    %194 = vmatprep.subr.mxu0 0.0
    %195 = vmatpush1.msra.mxu0 %v163
    %196 = vmatprep.subr.mxu0 0.0
    %197 = vmatpush1.msra.mxu0 0.0
    %198 = vmatprep.subr.mxu0 0.0
    %199 = vmatpush1.msra.mxu0 0.0
    %200 = vmatprep.subr.mxu0 0.0
    %201 = vmatpush1.msra.mxu0 0.0
    %202 = vmatprep.subr.mxu0 0.0
    %203 = vmatpush1.msra.mxu0 0.0
    %204 = vmatprep.subr.mxu0 0.0
    %205 = vmatpush1.msra.mxu0 0.0
    %206 = vmatprep.subr.mxu0 0.0
    %207 = vmatpush1.msra.mxu0 0.0
    %208 = vmatprep.subr.mxu0 0.0
    %209 = vmatpush1.msra.mxu0 0.0
    %210 = vmatprep.subr.mxu0 0.0
    %211 = vmatpush1.msra.mxu0 0.0
    %212 = vmatprep.subr.mxu0 0.0
    %213 = vmatpush1.msra.mxu0 0.0
    %214 = vmatprep.subr.mxu0 0.0
    %215 = vmatpush1.msra.mxu0 0.0
    %216 = vmatprep.subr.mxu0 0.0
    %217 = vmatpush1.msra.mxu0 0.0
    %218 = vmatprep.subr.mxu0 0.0
    %219 = vmatpush1.msra.mxu0 0.0
    %220 = vmatprep.subr.mxu0 0.0
    %221 = vmatpush1.msra.mxu0 0.0
    %222 = vmatprep.subr.mxu0 0.0
    %223 = vmatpush1.msra.mxu0 0.0
    %224 = vmatprep.subr.mxu0 0.0
    %225 = vmatpush1.msra.mxu0 0.0
    %226 = vmatprep.subr.mxu0 0.0
    %227 = vmatpush1.msra.mxu0 0.0
    %228 = vmatprep.mubr.f32.mxu0 0.0
    %229 = vmatmul.mubr.f32.gmra.mrb[0].mxu0 %v146
    %v230 = vpop.f32.mrb[0].mxu0
    %v231 = vadd.f32 0.0, %v230
    %v232 = vpop.f32.mrb[0].mxu0
    %233 = vdwg.mxu0
    %v234 = vadd.f32 %v147, %v231
    %235 = vst [vmem:[#allocation2] sm:$0xff] %v234
    // Predicated region
    $region30: #{tpu_custom_call.1} parent=1 // pred_check
      %p236 = pneg %p54
    $region31: #{tpu_custom_call.1} parent=1 // pred_check_branch
      %238 = sbr.rel (%p236) target = $region33
    $region32: #{tpu_custom_call.1} parent=1 // pred_region
      %v239 = vld [vmem:[#allocation2] sm:$0xff]
      %240 = vst [vmem:[#allocation9] sm:$0xff] %v239
    $region33: #{tpu_custom_call.1} parent=1 // pred_fallthru
      _
    // Predicated region
    $region34: #{tpu_custom_call.1} parent=1 // pred_check
      _
    $region35: #{tpu_custom_call.1} parent=1 // pred_check_branch
      %242 = sbr.rel (0) target = $region37
    $region36: #{tpu_custom_call.1} parent=1 // pred_region
      %s244 = ssub.s32 128, 128
      %245 = vsyncadd [#allocation5], %s244
      %s247 = sshll.u32 [#allocation9], 4
      %s248 = int_to_ptr.vmem [resolvable:$true] %s247
      %250 = dma.vmem_to_hbm [thread:$0]  %s248, 128, %s3, [#allocation5]
    $region37: #{tpu_custom_call.1} parent=1 // pred_fallthru
      _
    // Predicated region
    $region38: #{tpu_custom_call.1} parent=1 // pred_check
      _
    $region39: #{tpu_custom_call.1} parent=1 // pred_check_branch
      %252 = sbr.rel (0) target = $region41
    $region40: #{tpu_custom_call.1} parent=1 // pred_region
      %253 = dma.done [#allocation5], 128
    $region41: #{tpu_custom_call.1} parent=1 // pred_fallthru
      _
    %254 = vsyncpa [#allocation4], 1
    %255 = vsyncpa [#allocation7], 1
    %256 = vsyncpa [#allocation5], 1

</llo_original>
